<compile_context>
chip_gen: v6e
topology: v6e:2x2x1
jax: 0.10.0
libtpu: 0.0.40
codegen_flags: <defaults>
</compile_context>

<pallas_src>
import math

import jax
import jax.numpy as jnp
from jax.experimental import pallas as pl
from jax.experimental.pallas import tpu as pltpu


def _round_up(n, m):
    return ((n + m - 1) // m) * m


def _gru_cell_kernel(x_ref, hx_ref, wx_ref, whr_ref, whz_ref, whh_ref, b_ref,
                     out_ref):
    """One batch tile of the GRUCellM3 forward.

    Block shapes (all padded / lane-aligned):
      x_ref  : (TB, Ip)      hx_ref : (TB, Hp)
      wx_ref : (Ip, 3*Hp)    fused, pre-transposed [Wxr | Wxz | Wxh]
      wh*_ref: (Hp, Hp)      pre-transposed hidden weights
      b_ref  : (TB, 3*Hp)    per-sample bias [br | bz | bh]
      out_ref: (TB, Hp)
    """
    hp = out_ref.shape[-1]

    x = x_ref[...]
    hx = hx_ref[...]
    hx_f32 = hx.astype(jnp.float32)

    # Fused input projection for all three gates (one MXU dispatch) + bias.
    gx = jnp.dot(x, wx_ref[...], preferred_element_type=jnp.float32) + b_ref[...]
    gxr = gx[:, :hp]
    gxz = gx[:, hp:2 * hp]
    gxh = gx[:, 2 * hp:]

    # z gate: the module uses tanh(hx) for the hidden projection.
    th = jnp.tanh(hx_f32).astype(hx.dtype)
    qz = jax.nn.sigmoid(
        gxz + jnp.dot(th, whz_ref[...], preferred_element_type=jnp.float32))

    # r gate.
    qr = jax.nn.sigmoid(
        gxr + jnp.dot(hx, whr_ref[...], preferred_element_type=jnp.float32))

    # Candidate: (qr * hx) @ Whh.T  (data dependency on qr keeps this matmul separate).
    rh = (qr * hx_f32).astype(hx.dtype)
    htil = jnp.tanh(
        gxh + jnp.dot(rh, whh_ref[...], preferred_element_type=jnp.float32))

    # ht = htil * qz + hx * (1 - qz)   (note: NOT the standard-GRU blend order)
    ht = htil * qz + hx_f32 * (1.0 - qz)
    out_ref[...] = ht.astype(out_ref.dtype)


def prepare_gru_params(weight_ih, weight_hh, bias, *, compute_dtype=None):
    """One-time parameter preparation — hoist this out of any recurrent loop.

    Splits, transposes and zero-pads the weights to lane-aligned shapes, fuses
    the three input projections into a single (Ip, 3*Hp) matrix, and packs the
    per-sample bias as one (B, 3*Hp) block.  Pass compute_dtype=jnp.bfloat16 to
    feed bf16 operands to the MXU (accumulation stays f32 in the kernel).
    """
    three_h, in_size = weight_ih.shape
    hid = three_h // 3

    hp = _round_up(hid, 128)   # lane-dense gate width
    ip = _round_up(in_size, 128)

    if compute_dtype is None:
        compute_dtype = weight_ih.dtype

    def pad_t(w, k, kp):       # (H, K) row-major torch layout -> (Kp, Hp), zero-padded
        wt = jnp.asarray(w, compute_dtype).T
        return jnp.pad(wt, ((0, kp - k), (0, hp - hid)))

    wxr, wxz, wxh = weight_ih[:hid], weight_ih[hid:2 * hid], weight_ih[2 * hid:]
    whr, whz, whh = weight_hh[:hid], weight_hh[hid:2 * hid], weight_hh[2 * hid:]

    wx = jnp.concatenate(
        [pad_t(wxr, in_size, ip), pad_t(wxz, in_size, ip), pad_t(wxh, in_size, ip)],
        axis=1)                                               # (Ip, 3*Hp)

    def pad_bias_seg(b):
        return jnp.pad(jnp.asarray(b, compute_dtype), ((0, 0), (0, hp - hid)))

    b_cat = jnp.concatenate(
        [pad_bias_seg(bias[:, :hid]),
         pad_bias_seg(bias[:, hid:2 * hid]),
         pad_bias_seg(bias[:, 2 * hid:])], axis=1)            # (B, 3*Hp)

    return dict(wx=wx,
                whr=pad_t(whr, hid, hp),
                whz=pad_t(whz, hid, hp),
                whh=pad_t(whh, hid, hp),
                bias=b_cat)


@jax.jit
def gru_cell(params, x, hx):
    """GRUCellM3 forward.  x: (B, I), hx: (B, H)  ->  ht: (B, H)."""
    batch = x.shape[0]
    hid = hx.shape[1]

    wx = params["wx"]
    whr, whz, whh = params["whr"], params["whz"], params["whh"]
    b = params["bias"]

    ip = wx.shape[0]
    hp = whr.shape[0]

    # Batch tiling: largest sublane-aligned tile (capped) so weights stay
    # VMEM-resident across tiles and the batch axis pipelines / megacore-shards.
    tb = min(_round_up(batch, 8), 256)
    bp = _round_up(batch, tb)
    n_b = bp // tb

    cdt = wx.dtype
    x_p = jnp.pad(jnp.asarray(x, cdt), ((0, bp - batch), (0, ip - x.shape[1])))
    hx_p = jnp.pad(jnp.asarray(hx, cdt), ((0, bp - batch), (0, hp - hid)))
    b_p = jnp.pad(b, ((0, bp - b.shape[0]), (0, 0)))

    batch_tile = lambda i: (i, 0)
    resident = lambda i: (0, 0)

    out_p = pl.pallas_call(
        _gru_cell_kernel,
        out_shape=jax.ShapeDtypeStruct((bp, hp), hx_p.dtype),
        grid=(n_b,),
        in_specs=[
            pl.BlockSpec((tb, ip), batch_tile),        # x
            pl.BlockSpec((tb, hp), batch_tile),        # hx
            pl.BlockSpec((ip, 3 * hp), resident),      # fused Wx
            pl.BlockSpec((hp, hp), resident),          # Whr
            pl.BlockSpec((hp, hp), resident),          # Whz
            pl.BlockSpec((hp, hp), resident),          # Whh
            pl.BlockSpec((tb, 3 * hp), batch_tile),    # per-sample bias
        ],
        out_specs=pl.BlockSpec((tb, hp), batch_tile),
        # Reuse the hx buffer for ht (saves a (B, H) HBM alloc/writeback per step
        # when this cell is driven inside a recurrent loop).
        input_output_aliases={1: 0},
        compiler_params=pltpu.CompilerParams(
            dimension_semantics=("parallel",),
            vmem_limit_bytes=48 * 1024 * 1024,
        ),
    )(x_p, hx_p, wx, whr, whz, whh, b_p)

    return out_p[:batch, :hid].astype(hx.dtype)


def _reference(x, hx, weight_ih, weight_hh, bias):
    """Pure-JAX transcription of GRUCellM3.forward."""
    hid = hx.shape[1]
    wxr, wxz, wxh = weight_ih[:hid], weight_ih[hid:2 * hid], weight_ih[2 * hid:]
    whr, whz, whh = weight_hh[:hid], weight_hh[hid:2 * hid], weight_hh[2 * hid:]
    br, bz, bh = bias[:, :hid], bias[:, hid:2 * hid], bias[:, 2 * hid:]
    qz = jax.nn.sigmoid(x @ wxz.T + jnp.tanh(hx) @ whz.T + bz)
    qr = jax.nn.sigmoid(x @ wxr.T + hx @ whr.T + br)
    return jnp.tanh((qr * hx) @ whh.T + x @ wxh.T + bh) * qz + hx * (1 - qz)


if __name__ == "__main__":
    batch_size = 2
    input_size = 16
    hidden_size = 32

    key = jax.random.PRNGKey(0)
    k_x, k_h, k_wih, k_whh, k_b = jax.random.split(key, 5)

    # Deterministic init mimicking the torch module:
    #   kaiming_uniform_(a=sqrt(5)) -> U(-1/sqrt(fan_in), 1/sqrt(fan_in)).
    bound_ih = 1.0 / math.sqrt(input_size)
    bound_hh = 1.0 / math.sqrt(hidden_size)
    bound_b = 1.0 / math.sqrt(input_size)

    weight_ih = jax.random.uniform(
        k_wih, (3 * hidden_size, input_size), jnp.float32, -bound_ih, bound_ih)
    weight_hh = jax.random.uniform(
        k_whh, (3 * hidden_size, hidden_size), jnp.float32, -bound_hh, bound_hh)
    bias = jax.random.uniform(
        k_b, (batch_size, 3 * hidden_size), jnp.float32, -bound_b, bound_b)

    x = jax.random.normal(k_x, (batch_size, input_size), jnp.float32)
    hx = jax.random.normal(k_h, (batch_size, hidden_size), jnp.float32)

    # One-time weight prep (hoisted); per-step call only moves activations.
    params = prepare_gru_params(weight_ih, weight_hh, bias)

    out = gru_cell(params, x, hx)
    out = jax.block_until_ready(out)

    ref = _reference(x, hx, weight_ih, weight_hh, bias)
    assert out.shape == (batch_size, hidden_size)
    assert jnp.allclose(out, ref, atol=2e-5, rtol=2e-5), float(
        jnp.max(jnp.abs(out - ref)))

    print("KERNEL_OK")
</pallas_src>

<mosaic_0001>
module attributes {stable_mosaic.version = 11 : i64} {
  func.func @_gru_cell_kernel(%arg0: i32, %arg1: memref<8x128xf32, #tpu.memory_space<vmem>>, %arg2: memref<8x128xf32, #tpu.memory_space<vmem>>, %arg3: memref<128x384xf32, #tpu.memory_space<vmem>>, %arg4: memref<128x128xf32, #tpu.memory_space<vmem>>, %arg5: memref<128x128xf32, #tpu.memory_space<vmem>>, %arg6: memref<128x128xf32, #tpu.memory_space<vmem>>, %arg7: memref<8x384xf32, #tpu.memory_space<vmem>>, %arg8: memref<8x128xf32, #tpu.memory_space<vmem>>) attributes {dimension_semantics = [#tpu.dimension_semantics<parallel>], iteration_bounds = array<i64: 1>, scalar_prefetch = 0 : i64, scratch_operands = 0 : i64, tpu.core_type = #tpu.core_type<tc>, window_params = [{transform_indices = @transform_0, window_bounds = array<i64: 8, 128>}, {transform_indices = @transform_1, window_bounds = array<i64: 8, 128>}, {pipeline_mode = #tpu.pipeline_mode<synchronous>, transform_indices = @transform_2, window_bounds = array<i64: 128, 384>}, {pipeline_mode = #tpu.pipeline_mode<synchronous>, transform_indices = @transform_3, window_bounds = array<i64: 128, 128>}, {pipeline_mode = #tpu.pipeline_mode<synchronous>, transform_indices = @transform_4, window_bounds = array<i64: 128, 128>}, {pipeline_mode = #tpu.pipeline_mode<synchronous>, transform_indices = @transform_5, window_bounds = array<i64: 128, 128>}, {transform_indices = @transform_6, window_bounds = array<i64: 8, 384>}, {transform_indices = @transform_7, window_bounds = array<i64: 8, 128>}]} {
    %c0 = arith.constant 0 : index
    %c0_0 = arith.constant 0 : index
    %0 = vector.load %arg1[%c0, %c0_0] : memref<8x128xf32, #tpu.memory_space<vmem>>, vector<8x128xf32>
    %c0_1 = arith.constant 0 : index
    %c0_2 = arith.constant 0 : index
    %1 = vector.load %arg2[%c0_1, %c0_2] : memref<8x128xf32, #tpu.memory_space<vmem>>, vector<8x128xf32>
    %c0_3 = arith.constant 0 : index
    %c0_4 = arith.constant 0 : index
    %2 = vector.load %arg3[%c0_3, %c0_4] : memref<128x384xf32, #tpu.memory_space<vmem>>, vector<128x384xf32>
    %cst = arith.constant dense<0.000000e+00> : vector<8x384xf32>
    %3 = tpu.matmul %0, %2, %cst {dimension_numbers = #tpu.dot_dimension_numbers<[1], [0], [0], [1], [0, 0, 1, 1], [], []>} : vector<8x128xf32>, vector<128x384xf32>, vector<8x384xf32> -> vector<8x384xf32>
    %c0_5 = arith.constant 0 : index
    %c0_6 = arith.constant 0 : index
    %4 = vector.load %arg7[%c0_5, %c0_6] : memref<8x384xf32, #tpu.memory_space<vmem>>, vector<8x384xf32>
    %5 = arith.addf %3, %4 : vector<8x384xf32>
    %6 = vector.extract_strided_slice %5 {offsets = [0, 0], sizes = [8, 128], strides = [1, 1]} : vector<8x384xf32> to vector<8x128xf32>
    %7 = vector.extract_strided_slice %5 {offsets = [0, 128], sizes = [8, 128], strides = [1, 1]} : vector<8x384xf32> to vector<8x128xf32>
    %8 = vector.extract_strided_slice %5 {offsets = [0, 256], sizes = [8, 128], strides = [1, 1]} : vector<8x384xf32> to vector<8x128xf32>
    %9 = math.tanh %1 : vector<8x128xf32>
    %c0_7 = arith.constant 0 : index
    %c0_8 = arith.constant 0 : index
    %10 = vector.load %arg5[%c0_7, %c0_8] : memref<128x128xf32, #tpu.memory_space<vmem>>, vector<128x128xf32>
    %cst_9 = arith.constant dense<0.000000e+00> : vector<8x128xf32>
    %11 = tpu.matmul %9, %10, %cst_9 {dimension_numbers = #tpu.dot_dimension_numbers<[1], [0], [0], [1], [0, 0, 1, 1], [], []>} : vector<8x128xf32>, vector<128x128xf32>, vector<8x128xf32> -> vector<8x128xf32>
    %12 = arith.addf %7, %11 : vector<8x128xf32>
    %13 = arith.negf %12 : vector<8x128xf32>
    %14 = math.exp %13 : vector<8x128xf32>
    %cst_10 = arith.constant 1.000000e+00 : f32
    %15 = vector.broadcast %cst_10 : f32 to vector<8x128xf32>
    %16 = arith.addf %15, %14 : vector<8x128xf32>
    %17 = arith.divf %15, %16 : vector<8x128xf32>
    %c0_11 = arith.constant 0 : index
    %c0_12 = arith.constant 0 : index
    %18 = vector.load %arg4[%c0_11, %c0_12] : memref<128x128xf32, #tpu.memory_space<vmem>>, vector<128x128xf32>
    %cst_13 = arith.constant dense<0.000000e+00> : vector<8x128xf32>
    %19 = tpu.matmul %1, %18, %cst_13 {dimension_numbers = #tpu.dot_dimension_numbers<[1], [0], [0], [1], [0, 0, 1, 1], [], []>} : vector<8x128xf32>, vector<128x128xf32>, vector<8x128xf32> -> vector<8x128xf32>
    %20 = arith.addf %6, %19 : vector<8x128xf32>
    %21 = arith.negf %20 : vector<8x128xf32>
    %22 = math.exp %21 : vector<8x128xf32>
    %cst_14 = arith.constant 1.000000e+00 : f32
    %23 = vector.broadcast %cst_14 : f32 to vector<8x128xf32>
    %24 = arith.addf %23, %22 : vector<8x128xf32>
    %25 = arith.divf %23, %24 : vector<8x128xf32>
    %26 = arith.mulf %25, %1 : vector<8x128xf32>
    %c0_15 = arith.constant 0 : index
    %c0_16 = arith.constant 0 : index
    %27 = vector.load %arg6[%c0_15, %c0_16] : memref<128x128xf32, #tpu.memory_space<vmem>>, vector<128x128xf32>
    %cst_17 = arith.constant dense<0.000000e+00> : vector<8x128xf32>
    %28 = tpu.matmul %26, %27, %cst_17 {dimension_numbers = #tpu.dot_dimension_numbers<[1], [0], [0], [1], [0, 0, 1, 1], [], []>} : vector<8x128xf32>, vector<128x128xf32>, vector<8x128xf32> -> vector<8x128xf32>
    %29 = arith.addf %8, %28 : vector<8x128xf32>
    %30 = math.tanh %29 : vector<8x128xf32>
    %31 = arith.mulf %30, %17 : vector<8x128xf32>
    %cst_18 = arith.constant 1.000000e+00 : f32
    %32 = vector.broadcast %cst_18 : f32 to vector<8x128xf32>
    %33 = arith.subf %32, %17 : vector<8x128xf32>
    %34 = arith.mulf %1, %33 : vector<8x128xf32>
    %35 = arith.addf %31, %34 : vector<8x128xf32>
    %c0_19 = arith.constant 0 : index
    %c0_20 = arith.constant 0 : index
    %36 = vector.load %arg8[%c0_19, %c0_20] : memref<8x128xf32, #tpu.memory_space<vmem>>, vector<8x128xf32>
    tpu.vector_store %arg8[%c0_19, %c0_20], %35 {strides = array<i32>} : memref<8x128xf32, #tpu.memory_space<vmem>>, vector<8x128xf32>,
    return
  }
  func.func @transform_0(%arg0: i32) -> (i32, i32) {
    %c0_i32 = arith.constant 0 : i32
    %c0_i32_0 = arith.constant 0 : i32
    return %arg0, %c0_i32 : i32, i32
  }
  func.func @transform_1(%arg0: i32) -> (i32, i32) {
    %c0_i32 = arith.constant 0 : i32
    %c0_i32_0 = arith.constant 0 : i32
    return %arg0, %c0_i32 : i32, i32
  }
  func.func @transform_2(%arg0: i32) -> (i32, i32) {
    %c0_i32 = arith.constant 0 : i32
    %c0_i32_0 = arith.constant 0 : i32
    %c0_i32_1 = arith.constant 0 : i32
    return %c0_i32, %c0_i32_0 : i32, i32
  }
  func.func @transform_3(%arg0: i32) -> (i32, i32) {
    %c0_i32 = arith.constant 0 : i32
    %c0_i32_0 = arith.constant 0 : i32
    %c0_i32_1 = arith.constant 0 : i32
    return %c0_i32, %c0_i32_0 : i32, i32
  }
  func.func @transform_4(%arg0: i32) -> (i32, i32) {
    %c0_i32 = arith.constant 0 : i32
    %c0_i32_0 = arith.constant 0 : i32
    %c0_i32_1 = arith.constant 0 : i32
    return %c0_i32, %c0_i32_0 : i32, i32
  }
  func.func @transform_5(%arg0: i32) -> (i32, i32) {
    %c0_i32 = arith.constant 0 : i32
    %c0_i32_0 = arith.constant 0 : i32
    %c0_i32_1 = arith.constant 0 : i32
    return %c0_i32, %c0_i32_0 : i32, i32
  }
  func.func @transform_6(%arg0: i32) -> (i32, i32) {
    %c0_i32 = arith.constant 0 : i32
    %c0_i32_0 = arith.constant 0 : i32
    return %arg0, %c0_i32 : i32, i32
  }
  func.func @transform_7(%arg0: i32) -> (i32, i32) {
    %c0_i32 = arith.constant 0 : i32
    %c0_i32_0 = arith.constant 0 : i32
    return %arg0, %c0_i32 : i32, i32
  }
}

</mosaic_0001>

<llo_original>
// kernel: gru_cell.1
$region0: #{gru_cell.1}
  #allocation0 [shape = 'u32[]', space=smem, size = 0x4, offset = 0x4, fixed_abs, tag = 'smem constant byte address 0x4 - core index']
  #allocation1 [shape = 'u32[144,128]{1,0:T(1,128)}', space=vmem, size = 0x12000, scoped, tag = 'internal scratch']
  %s0 = inlined_call_operand.vmem [shape: f32[8,128], index: 0, kind: input, shape index: {}]
  %s1 = inlined_call_operand.vmem [shape: f32[8,128], index: 1, kind: input, shape index: {}, may-alias: {1,7}]
  %s2 = inlined_call_operand.hbm [shape: f32[128,384], index: 2, kind: input, shape index: {}]
  %s3 = inlined_call_operand.hbm [shape: f32[128,128], index: 3, kind: input, shape index: {}]
  %s4 = inlined_call_operand.hbm [shape: f32[128,128], index: 4, kind: input, shape index: {}]
  %s5 = inlined_call_operand.hbm [shape: f32[128,128], index: 5, kind: input, shape index: {}]
  %s6 = inlined_call_operand.vmem [shape: f32[8,384], index: 6, kind: input, shape index: {}]
  %s7 = inlined_call_operand.vmem [shape: f32[8,128], index: 7, kind: output, shape index: {}, may-alias: {1,7}]
  %s8 = sld [smem:[#allocation0]]
  $region54: #{gru_cell.1} parent=0
    _
  %s10 = ssub.s32 1, %s8
  %s11 = scalar_select 0, %s10, %s8
  $region1: #{gru_cell.1} parent=0
    #allocation2 [shape = 'u8[196608]{0}', space=vmem, size = 0x30000, scoped, tag = 'input window, operand 2, single buffered']
    #allocation3 [shape = 's32[1]{0}', space=sflag, size = 0x4, scoped, tag = 'scoped memory for gru_cell.1']
    #allocation4 [shape = 'u8[65536]{0}', space=vmem, size = 0x10000, scoped, tag = 'input window, operand 3, single buffered']
    #allocation5 [shape = 's32[1]{0}', space=sflag, size = 0x4, scoped, tag = 'scoped memory for gru_cell.1']
    #allocation6 [shape = 'u8[65536]{0}', space=vmem, size = 0x10000, scoped, tag = 'input window, operand 4, single buffered']
    #allocation7 [shape = 'u8[65536]{0}', space=vmem, size = 0x10000, scoped, tag = 'input window, operand 5, single buffered']
    #allocation8 [shape = 's32[1]{0}', space=sflag, size = 0x4, scoped, tag = 'scoped memory for gru_cell.1']
    %12 = vsyncpa [#allocation3], 0
    %13 = vsyncpa [#allocation5], 0
    %14 = vsyncpa [#allocation8], 0
    // Predicated region
    $region2: #{gru_cell.1} parent=1 // pred_check
      _
    $region3: #{gru_cell.1} parent=1 // pred_check_branch
      %16 = sbr.rel (0) target = $region5
    $region4: #{gru_cell.1} parent=1 // pred_region
      _
    $region5: #{gru_cell.1} parent=1 // pred_fallthru
      _
    // Predicated region
    $region6: #{gru_cell.1} parent=1 // pred_check
      _
    $region7: #{gru_cell.1} parent=1 // pred_check_branch
      %18 = sbr.rel (0) target = $region9
    $region8: #{gru_cell.1} parent=1 // pred_region
      _
    $region9: #{gru_cell.1} parent=1 // pred_fallthru
      _
    // Predicated region
    $region10: #{gru_cell.1} parent=1 // pred_check
      _
    $region11: #{gru_cell.1} parent=1 // pred_check_branch
      %20 = sbr.rel (0) target = $region13
    $region12: #{gru_cell.1} parent=1 // pred_region
      %s22 = ssub.s32 6144, 6144
      %23 = vsyncadd [#allocation3], %s22
      %s24 = sshll.u32 [#allocation2], 4
      %s25 = int_to_ptr.vmem [resolvable:$true] %s24
      %30 = dma.hbm_to_vmem [thread:$0]  %s2, 6144, %s25, [#allocation3], 384, 384, 24
    $region13: #{gru_cell.1} parent=1 // pred_fallthru
      _
    // Predicated region
    $region14: #{gru_cell.1} parent=1 // pred_check
      _
    $region15: #{gru_cell.1} parent=1 // pred_check_branch
      %32 = sbr.rel (0) target = $region17
    $region16: #{gru_cell.1} parent=1 // pred_region
      %s34 = ssub.s32 2048, 2048
      %35 = vsyncadd [#allocation5], %s34
      %s36 = sshll.u32 [#allocation4], 4
      %s37 = int_to_ptr.vmem [resolvable:$true] %s36
      %42 = dma.hbm_to_vmem [thread:$0]  %s3, 2048, %s37, [#allocation5], 128, 128, 8
    $region17: #{gru_cell.1} parent=1 // pred_fallthru
      _
    // Predicated region
    $region18: #{gru_cell.1} parent=1 // pred_check
      _
    $region19: #{gru_cell.1} parent=1 // pred_check_branch
      %44 = sbr.rel (0) target = $region21
    $region20: #{gru_cell.1} parent=1 // pred_region
      %s46 = ssub.s32 2048, 2048
      %47 = vsyncadd [#allocation5], %s46
      %s48 = sshll.u32 [#allocation6], 4
      %s49 = int_to_ptr.vmem [resolvable:$true] %s48
      %54 = dma.hbm_to_vmem [thread:$0]  %s4, 2048, %s49, [#allocation5], 128, 128, 8
    $region21: #{gru_cell.1} parent=1 // pred_fallthru
      _
    // Predicated region
    $region22: #{gru_cell.1} parent=1 // pred_check
      _
    $region23: #{gru_cell.1} parent=1 // pred_check_branch
      %56 = sbr.rel (0) target = $region25
    $region24: #{gru_cell.1} parent=1 // pred_region
      %s58 = ssub.s32 2048, 2048
      %59 = vsyncadd [#allocation8], %s58
      %s60 = sshll.u32 [#allocation7], 4
      %s61 = int_to_ptr.vmem [resolvable:$true] %s60
      %66 = dma.hbm_to_vmem [thread:$0]  %s5, 2048, %s61, [#allocation8], 128, 128, 8
    $region25: #{gru_cell.1} parent=1 // pred_fallthru
      _
    // Predicated region
    $region26: #{gru_cell.1} parent=1 // pred_check
      _
    $region27: #{gru_cell.1} parent=1 // pred_check_branch
      %68 = sbr.rel (0) target = $region29
    $region28: #{gru_cell.1} parent=1 // pred_region
      _
    $region29: #{gru_cell.1} parent=1 // pred_fallthru
      _
    // Predicated region
    $region30: #{gru_cell.1} parent=1 // pred_check
      _
    $region31: #{gru_cell.1} parent=1 // pred_check_branch
      %70 = sbr.rel (0) target = $region33
    $region32: #{gru_cell.1} parent=1 // pred_region
      %71 = dma.done [#allocation3], 6144
    $region33: #{gru_cell.1} parent=1 // pred_fallthru
      _
    // Predicated region
    $region34: #{gru_cell.1} parent=1 // pred_check
      _
    $region35: #{gru_cell.1} parent=1 // pred_check_branch
      %73 = sbr.rel (0) target = $region37
    $region36: #{gru_cell.1} parent=1 // pred_region
      %74 = dma.done [#allocation5], 2048
    $region37: #{gru_cell.1} parent=1 // pred_fallthru
      _
    // Predicated region
    $region38: #{gru_cell.1} parent=1 // pred_check
      _
    $region39: #{gru_cell.1} parent=1 // pred_check_branch
      %76 = sbr.rel (0) target = $region41
    $region40: #{gru_cell.1} parent=1 // pred_region
      %77 = dma.done [#allocation5], 2048
    $region41: #{gru_cell.1} parent=1 // pred_fallthru
      _
    // Predicated region
    $region42: #{gru_cell.1} parent=1 // pred_check
      _
    $region43: #{gru_cell.1} parent=1 // pred_check_branch
      %79 = sbr.rel (0) target = $region45
    $region44: #{gru_cell.1} parent=1 // pred_region
      %80 = dma.done [#allocation8], 2048
    $region45: #{gru_cell.1} parent=1 // pred_fallthru
      _
    %v81 = vld [vmem:[%s0] sm:$0xff]
    %v82 = vld [vmem:[%s1] sm:$0xff]
    %v83 = vld [vmem:[#allocation2] sm:$0xff]
    %v84 = vld [vmem:[#allocation2 + $0x8] sm:$0xff]
    %v85 = vld [vmem:[#allocation2 + $0x10] sm:$0xff]
    %v86 = vld [vmem:[#allocation2 + $0x18] sm:$0xff]
    %v87 = vld [vmem:[#allocation2 + $0x20] sm:$0xff]
    %v88 = vld [vmem:[#allocation2 + $0x28] sm:$0xff]
    %v89 = vld [vmem:[#allocation2 + $0x30] sm:$0xff]
    %v90 = vld [vmem:[#allocation2 + $0x38] sm:$0xff]
    %v91 = vld [vmem:[#allocation2 + $0x40] sm:$0xff]
    %v92 = vld [vmem:[#allocation2 + $0x48] sm:$0xff]
    %v93 = vld [vmem:[#allocation2 + $0x50] sm:$0xff]
    %v94 = vld [vmem:[#allocation2 + $0x58] sm:$0xff]
    %v95 = vld [vmem:[#allocation2 + $0x60] sm:$0xff]
    %v96 = vld [vmem:[#allocation2 + $0x68] sm:$0xff]
    %v97 = vld [vmem:[#allocation2 + $0x70] sm:$0xff]
    %v98 = vld [vmem:[#allocation2 + $0x78] sm:$0xff]
    %v99 = vld [vmem:[#allocation2 + $0x80] sm:$0xff]
    %v100 = vld [vmem:[#allocation2 + $0x88] sm:$0xff]
    %v101 = vld [vmem:[#allocation2 + $0x90] sm:$0xff]
    %v102 = vld [vmem:[#allocation2 + $0x98] sm:$0xff]
    %v103 = vld [vmem:[#allocation2 + $0xa0] sm:$0xff]
    %v104 = vld [vmem:[#allocation2 + $0xa8] sm:$0xff]
    %v105 = vld [vmem:[#allocation2 + $0xb0] sm:$0xff]
    %v106 = vld [vmem:[#allocation2 + $0xb8] sm:$0xff]
    %v107 = vld [vmem:[#allocation2 + $0xc0] sm:$0xff]
    %v108 = vld [vmem:[#allocation2 + $0xc8] sm:$0xff]
    %v109 = vld [vmem:[#allocation2 + $0xd0] sm:$0xff]
    %v110 = vld [vmem:[#allocation2 + $0xd8] sm:$0xff]
    %v111 = vld [vmem:[#allocation2 + $0xe0] sm:$0xff]
    %v112 = vld [vmem:[#allocation2 + $0xe8] sm:$0xff]
    %v113 = vld [vmem:[#allocation2 + $0xf0] sm:$0xff]
    %v114 = vld [vmem:[#allocation2 + $0xf8] sm:$0xff]
    %v115 = vld [vmem:[#allocation2 + $0x100] sm:$0xff]
    %v116 = vld [vmem:[#allocation2 + $0x108] sm:$0xff]
    %v117 = vld [vmem:[#allocation2 + $0x110] sm:$0xff]
    %v118 = vld [vmem:[#allocation2 + $0x118] sm:$0xff]
    %v119 = vld [vmem:[#allocation2 + $0x120] sm:$0xff]
    %v120 = vld [vmem:[#allocation2 + $0x128] sm:$0xff]
    %v121 = vld [vmem:[#allocation2 + $0x130] sm:$0xff]
    %v122 = vld [vmem:[#allocation2 + $0x138] sm:$0xff]
    %v123 = vld [vmem:[#allocation2 + $0x140] sm:$0xff]
    %v124 = vld [vmem:[#allocation2 + $0x148] sm:$0xff]
    %v125 = vld [vmem:[#allocation2 + $0x150] sm:$0xff]
    %v126 = vld [vmem:[#allocation2 + $0x158] sm:$0xff]
    %v127 = vld [vmem:[#allocation2 + $0x160] sm:$0xff]
    %v128 = vld [vmem:[#allocation2 + $0x168] sm:$0xff]
    %v129 = vld [vmem:[#allocation2 + $0x170] sm:$0xff]
    %v130 = vld [vmem:[#allocation2 + $0x178] sm:$0xff]
    %v131 = vld [vmem:[%s6] sm:$0xff]
    %v132 = vld [vmem:[%s6 + $0x8] sm:$0xff]
    %v133 = vld [vmem:[%s6 + $0x10] sm:$0xff]
    %134 = vmatprep.subr.mxu0 %v129
    %135 = vmatpush1.msra.mxu0 %v128
    %136 = vmatprep.subr.mxu0 %v126
    %137 = vmatpush1.msra.mxu0 %v125
    %138 = vmatprep.subr.mxu0 %v123
    %139 = vmatpush1.msra.mxu0 %v122
    %140 = vmatprep.subr.mxu0 %v120
    %141 = vmatpush1.msra.mxu0 %v119
    %142 = vmatprep.subr.mxu0 %v117
    %143 = vmatpush1.msra.mxu0 %v116
    %144 = vmatprep.subr.mxu0 %v114
    %145 = vmatpush1.msra.mxu0 %v113
    %146 = vmatprep.subr.mxu0 %v111
    %147 = vmatpush1.msra.mxu0 %v110
    %148 = vmatprep.subr.mxu0 %v108
    %149 = vmatpush1.msra.mxu0 %v107
    %150 = vmatprep.subr.mxu0 %v105
    %151 = vmatpush1.msra.mxu0 %v104
    %152 = vmatprep.subr.mxu0 %v102
    %153 = vmatpush1.msra.mxu0 %v101
    %154 = vmatprep.subr.mxu0 %v99
    %155 = vmatpush1.msra.mxu0 %v98
    %156 = vmatprep.subr.mxu0 %v96
    %157 = vmatpush1.msra.mxu0 %v95
    %158 = vmatprep.subr.mxu0 %v93
    %159 = vmatpush1.msra.mxu0 %v92
    %160 = vmatprep.subr.mxu0 %v90
    %161 = vmatpush1.msra.mxu0 %v89
    %162 = vmatprep.subr.mxu0 %v87
    %163 = vmatpush1.msra.mxu0 %v86
    %164 = vmatprep.subr.mxu0 %v84
    %165 = vmatpush1.msra.mxu0 %v83
    %166 = vmatprep.subr.mxu0 0.0
    %167 = vmatpush2.msra.mxu0 0.0
    %168 = vmatprep.subr.mxu0 0.0
    %169 = vmatpush2.msra.mxu0 0.0
    %170 = vmatprep.subr.mxu0 0.0
    %171 = vmatpush2.msra.mxu0 0.0
    %172 = vmatprep.subr.mxu0 0.0
    %173 = vmatpush2.msra.mxu0 0.0
    %174 = vmatprep.subr.mxu0 0.0
    %175 = vmatpush2.msra.mxu0 0.0
    %176 = vmatprep.subr.mxu0 0.0
    %177 = vmatpush2.msra.mxu0 0.0
    %178 = vmatprep.subr.mxu0 0.0
    %179 = vmatpush2.msra.mxu0 0.0
    %180 = vmatprep.subr.mxu0 0.0
    %181 = vmatpush2.msra.mxu0 0.0
    %182 = vmatprep.subr.mxu0 0.0
    %183 = vmatpush2.msra.mxu0 0.0
    %184 = vmatprep.subr.mxu0 0.0
    %185 = vmatpush2.msra.mxu0 0.0
    %186 = vmatprep.subr.mxu0 0.0
    %187 = vmatpush2.msra.mxu0 0.0
    %188 = vmatprep.subr.mxu0 0.0
    %189 = vmatpush2.msra.mxu0 0.0
    %190 = vmatprep.subr.mxu0 0.0
    %191 = vmatpush2.msra.mxu0 0.0
    %192 = vmatprep.subr.mxu0 0.0
    %193 = vmatpush2.msra.mxu0 0.0
    %194 = vmatprep.subr.mxu0 0.0
    %195 = vmatpush2.msra.mxu0 0.0
    %196 = vmatprep.subr.mxu0 0.0
    %197 = vmatpush2.msra.mxu0 0.0
    %198 = vmatprep.mubr.f32.mxu0 0.0
    %199 = vmatmul.mubr.f32.gmra.mxu0 %v81
    %v200 = vpop.f32.mrf.mxu0
    %v201 = vadd.f32 %v131, %v200
    %v202 = vpop.f32.mrf.mxu0
    %v203 = vadd.f32 %v132, %v202
    %204 = vdwg.mxu0
    %205 = vmatprep.subr.mxu0 0.0
    %206 = vmatpush1.msra.mxu0 %v130
    %207 = vmatprep.subr.mxu0 0.0
    %208 = vmatpush1.msra.mxu0 %v127
    %209 = vmatprep.subr.mxu0 0.0
    %210 = vmatpush1.msra.mxu0 %v124
    %211 = vmatprep.subr.mxu0 0.0
    %212 = vmatpush1.msra.mxu0 %v121
    %213 = vmatprep.subr.mxu0 0.0
    %214 = vmatpush1.msra.mxu0 %v118
    %215 = vmatprep.subr.mxu0 0.0
    %216 = vmatpush1.msra.mxu0 %v115
    %217 = vmatprep.subr.mxu0 0.0
    %218 = vmatpush1.msra.mxu0 %v112
    %219 = vmatprep.subr.mxu0 0.0
    %220 = vmatpush1.msra.mxu0 %v109
    %221 = vmatprep.subr.mxu0 0.0
    %222 = vmatpush1.msra.mxu0 %v106
    %223 = vmatprep.subr.mxu0 0.0
    %224 = vmatpush1.msra.mxu0 %v103
    %225 = vmatprep.subr.mxu0 0.0
    %226 = vmatpush1.msra.mxu0 %v100
    %227 = vmatprep.subr.mxu0 0.0
    %228 = vmatpush1.msra.mxu0 %v97
    %229 = vmatprep.subr.mxu0 0.0
    %230 = vmatpush1.msra.mxu0 %v94
    %231 = vmatprep.subr.mxu0 0.0
    %232 = vmatpush1.msra.mxu0 %v91
    %233 = vmatprep.subr.mxu0 0.0
    %234 = vmatpush1.msra.mxu0 %v88
    %235 = vmatprep.subr.mxu0 0.0
    %236 = vmatpush1.msra.mxu0 %v85
    %237 = vmatprep.subr.mxu0 0.0
    %238 = vmatpush2.msra.mxu0 0.0
    %239 = vmatprep.subr.mxu0 0.0
    %240 = vmatpush2.msra.mxu0 0.0
    %241 = vmatprep.subr.mxu0 0.0
    %242 = vmatpush2.msra.mxu0 0.0
    %243 = vmatprep.subr.mxu0 0.0
    %244 = vmatpush2.msra.mxu0 0.0
    %245 = vmatprep.subr.mxu0 0.0
    %246 = vmatpush2.msra.mxu0 0.0
    %247 = vmatprep.subr.mxu0 0.0
    %248 = vmatpush2.msra.mxu0 0.0
    %249 = vmatprep.subr.mxu0 0.0
    %250 = vmatpush2.msra.mxu0 0.0
    %251 = vmatprep.subr.mxu0 0.0
    %252 = vmatpush2.msra.mxu0 0.0
    %253 = vmatprep.subr.mxu0 0.0
    %254 = vmatpush2.msra.mxu0 0.0
    %255 = vmatprep.subr.mxu0 0.0
    %256 = vmatpush2.msra.mxu0 0.0
    %257 = vmatprep.subr.mxu0 0.0
    %258 = vmatpush2.msra.mxu0 0.0
    %259 = vmatprep.subr.mxu0 0.0
    %260 = vmatpush2.msra.mxu0 0.0
    %261 = vmatprep.subr.mxu0 0.0
    %262 = vmatpush2.msra.mxu0 0.0
    %263 = vmatprep.subr.mxu0 0.0
    %264 = vmatpush2.msra.mxu0 0.0
    %265 = vmatprep.subr.mxu0 0.0
    %266 = vmatpush2.msra.mxu0 0.0
    %267 = vmatprep.subr.mxu0 0.0
    %268 = vmatpush2.msra.mxu0 0.0
    %269 = vmatprep.mubr.f32.mxu0 0.0
    %270 = vmatmul.mubr.f32.gmra.mxu0 %v81
    %v271 = vpop.f32.mrf.mxu0
    %v272 = vadd.f32 %v133, %v271
    %v273 = vpop.f32.mrf.mxu0
    %274 = vdwg.mxu0
    %v275 = vtanh.pop %v82
    %v276 = vld [vmem:[#allocation6] sm:$0xff]
    %v277 = vld [vmem:[#allocation6 + $0x8] sm:$0xff]
    %v278 = vld [vmem:[#allocation6 + $0x10] sm:$0xff]
    %v279 = vld [vmem:[#allocation6 + $0x18] sm:$0xff]
    %v280 = vld [vmem:[#allocation6 + $0x20] sm:$0xff]
    %v281 = vld [vmem:[#allocation6 + $0x28] sm:$0xff]
    %v282 = vld [vmem:[#allocation6 + $0x30] sm:$0xff]
    %v283 = vld [vmem:[#allocation6 + $0x38] sm:$0xff]
    %v284 = vld [vmem:[#allocation6 + $0x40] sm:$0xff]
    %v285 = vld [vmem:[#allocation6 + $0x48] sm:$0xff]
    %v286 = vld [vmem:[#allocation6 + $0x50] sm:$0xff]
    %v287 = vld [vmem:[#allocation6 + $0x58] sm:$0xff]
    %v288 = vld [vmem:[#allocation6 + $0x60] sm:$0xff]
    %v289 = vld [vmem:[#allocation6 + $0x68] sm:$0xff]
    %v290 = vld [vmem:[#allocation6 + $0x70] sm:$0xff]
    %v291 = vld [vmem:[#allocation6 + $0x78] sm:$0xff]
    %292 = vmatprep.subr.mxu0 0.0
    %293 = vmatpush1.msra.mxu0 %v291
    %294 = vmatprep.subr.mxu0 0.0
    %295 = vmatpush1.msra.mxu0 %v290
    %296 = vmatprep.subr.mxu0 0.0
    %297 = vmatpush1.msra.mxu0 %v289
    %298 = vmatprep.subr.mxu0 0.0
    %299 = vmatpush1.msra.mxu0 %v288
    %300 = vmatprep.subr.mxu0 0.0
    %301 = vmatpush1.msra.mxu0 %v287
    %302 = vmatprep.subr.mxu0 0.0
    %303 = vmatpush1.msra.mxu0 %v286
    %304 = vmatprep.subr.mxu0 0.0
    %305 = vmatpush1.msra.mxu0 %v285
    %306 = vmatprep.subr.mxu0 0.0
    %307 = vmatpush1.msra.mxu0 %v284
    %308 = vmatprep.subr.mxu0 0.0
    %309 = vmatpush1.msra.mxu0 %v283
    %310 = vmatprep.subr.mxu0 0.0
    %311 = vmatpush1.msra.mxu0 %v282
    %312 = vmatprep.subr.mxu0 0.0
    %313 = vmatpush1.msra.mxu0 %v281
    %314 = vmatprep.subr.mxu0 0.0
    %315 = vmatpush1.msra.mxu0 %v280
    %316 = vmatprep.subr.mxu0 0.0
    %317 = vmatpush1.msra.mxu0 %v279
    %318 = vmatprep.subr.mxu0 0.0
    %319 = vmatpush1.msra.mxu0 %v278
    %320 = vmatprep.subr.mxu0 0.0
    %321 = vmatpush1.msra.mxu0 %v277
    %322 = vmatprep.subr.mxu0 0.0
    %323 = vmatpush1.msra.mxu0 %v276
    %324 = vmatprep.subr.mxu0 0.0
    %325 = vmatpush2.msra.mxu0 0.0
    %326 = vmatprep.subr.mxu0 0.0
    %327 = vmatpush2.msra.mxu0 0.0
    %328 = vmatprep.subr.mxu0 0.0
    %329 = vmatpush2.msra.mxu0 0.0
    %330 = vmatprep.subr.mxu0 0.0
    %331 = vmatpush2.msra.mxu0 0.0
    %332 = vmatprep.subr.mxu0 0.0
    %333 = vmatpush2.msra.mxu0 0.0
    %334 = vmatprep.subr.mxu0 0.0
    %335 = vmatpush2.msra.mxu0 0.0
    %336 = vmatprep.subr.mxu0 0.0
    %337 = vmatpush2.msra.mxu0 0.0
    %338 = vmatprep.subr.mxu0 0.0
    %339 = vmatpush2.msra.mxu0 0.0
    %340 = vmatprep.subr.mxu0 0.0
    %341 = vmatpush2.msra.mxu0 0.0
    %342 = vmatprep.subr.mxu0 0.0
    %343 = vmatpush2.msra.mxu0 0.0
    %344 = vmatprep.subr.mxu0 0.0
    %345 = vmatpush2.msra.mxu0 0.0
    %346 = vmatprep.subr.mxu0 0.0
    %347 = vmatpush2.msra.mxu0 0.0
    %348 = vmatprep.subr.mxu0 0.0
    %349 = vmatpush2.msra.mxu0 0.0
    %350 = vmatprep.subr.mxu0 0.0
    %351 = vmatpush2.msra.mxu0 0.0
    %352 = vmatprep.subr.mxu0 0.0
    %353 = vmatpush2.msra.mxu0 0.0
    %354 = vmatprep.subr.mxu0 0.0
    %355 = vmatpush2.msra.mxu0 0.0
    %356 = vmatprep.mubr.f32.mxu0 0.0
    %357 = vmatmul.mubr.f32.gmra.mxu0 %v275
    %v358 = vpop.f32.mrf.mxu0
    %v359 = vadd.f32 0.0, %v358
    %v360 = vpop.f32.mrf.mxu0
    %361 = vdwg.mxu0
    %v362 = vadd.f32 %v203, %v359
    %v363 = vxor.u32 %v362, 2147483648
    %v364 = vmul.f32 %v363, 1.442695
    %v365 = vpow.pop %v364
    %v366 = vadd.f32 %v365, 1.0
    %v367 = vrcp.pop %v366
    %v368 = vmul.f32 1.0, %v367
    %v369 = vld [vmem:[#allocation4] sm:$0xff]
    %v370 = vld [vmem:[#allocation4 + $0x8] sm:$0xff]
    %v371 = vld [vmem:[#allocation4 + $0x10] sm:$0xff]
    %v372 = vld [vmem:[#allocation4 + $0x18] sm:$0xff]
    %v373 = vld [vmem:[#allocation4 + $0x20] sm:$0xff]
    %v374 = vld [vmem:[#allocation4 + $0x28] sm:$0xff]
    %v375 = vld [vmem:[#allocation4 + $0x30] sm:$0xff]
    %v376 = vld [vmem:[#allocation4 + $0x38] sm:$0xff]
    %v377 = vld [vmem:[#allocation4 + $0x40] sm:$0xff]
    %v378 = vld [vmem:[#allocation4 + $0x48] sm:$0xff]
    %v379 = vld [vmem:[#allocation4 + $0x50] sm:$0xff]
    %v380 = vld [vmem:[#allocation4 + $0x58] sm:$0xff]
    %v381 = vld [vmem:[#allocation4 + $0x60] sm:$0xff]
    %v382 = vld [vmem:[#allocation4 + $0x68] sm:$0xff]
    %v383 = vld [vmem:[#allocation4 + $0x70] sm:$0xff]
    %v384 = vld [vmem:[#allocation4 + $0x78] sm:$0xff]
    %385 = vmatprep.subr.mxu0 0.0
    %386 = vmatpush1.msra.mxu0 %v384
    %387 = vmatprep.subr.mxu0 0.0
    %388 = vmatpush1.msra.mxu0 %v383
    %389 = vmatprep.subr.mxu0 0.0
    %390 = vmatpush1.msra.mxu0 %v382
    %391 = vmatprep.subr.mxu0 0.0
    %392 = vmatpush1.msra.mxu0 %v381
    %393 = vmatprep.subr.mxu0 0.0
    %394 = vmatpush1.msra.mxu0 %v380
    %395 = vmatprep.subr.mxu0 0.0
    %396 = vmatpush1.msra.mxu0 %v379
    %397 = vmatprep.subr.mxu0 0.0
    %398 = vmatpush1.msra.mxu0 %v378
    %399 = vmatprep.subr.mxu0 0.0
    %400 = vmatpush1.msra.mxu0 %v377
    %401 = vmatprep.subr.mxu0 0.0
    %402 = vmatpush1.msra.mxu0 %v376
    %403 = vmatprep.subr.mxu0 0.0
    %404 = vmatpush1.msra.mxu0 %v375
    %405 = vmatprep.subr.mxu0 0.0
    %406 = vmatpush1.msra.mxu0 %v374
    %407 = vmatprep.subr.mxu0 0.0
    %408 = vmatpush1.msra.mxu0 %v373
    %409 = vmatprep.subr.mxu0 0.0
    %410 = vmatpush1.msra.mxu0 %v372
    %411 = vmatprep.subr.mxu0 0.0
    %412 = vmatpush1.msra.mxu0 %v371
    %413 = vmatprep.subr.mxu0 0.0
    %414 = vmatpush1.msra.mxu0 %v370
    %415 = vmatprep.subr.mxu0 0.0
    %416 = vmatpush1.msra.mxu0 %v369
    %417 = vmatprep.subr.mxu0 0.0
    %418 = vmatpush2.msra.mxu0 0.0
    %419 = vmatprep.subr.mxu0 0.0
    %420 = vmatpush2.msra.mxu0 0.0
    %421 = vmatprep.subr.mxu0 0.0
    %422 = vmatpush2.msra.mxu0 0.0
    %423 = vmatprep.subr.mxu0 0.0
    %424 = vmatpush2.msra.mxu0 0.0
    %425 = vmatprep.subr.mxu0 0.0
    %426 = vmatpush2.msra.mxu0 0.0
    %427 = vmatprep.subr.mxu0 0.0
    %428 = vmatpush2.msra.mxu0 0.0
    %429 = vmatprep.subr.mxu0 0.0
    %430 = vmatpush2.msra.mxu0 0.0
    %431 = vmatprep.subr.mxu0 0.0
    %432 = vmatpush2.msra.mxu0 0.0
    %433 = vmatprep.subr.mxu0 0.0
    %434 = vmatpush2.msra.mxu0 0.0
    %435 = vmatprep.subr.mxu0 0.0
    %436 = vmatpush2.msra.mxu0 0.0
    %437 = vmatprep.subr.mxu0 0.0
    %438 = vmatpush2.msra.mxu0 0.0
    %439 = vmatprep.subr.mxu0 0.0
    %440 = vmatpush2.msra.mxu0 0.0
    %441 = vmatprep.subr.mxu0 0.0
    %442 = vmatpush2.msra.mxu0 0.0
    %443 = vmatprep.subr.mxu0 0.0
    %444 = vmatpush2.msra.mxu0 0.0
    %445 = vmatprep.subr.mxu0 0.0
    %446 = vmatpush2.msra.mxu0 0.0
    %447 = vmatprep.subr.mxu0 0.0
    %448 = vmatpush2.msra.mxu0 0.0
    %449 = vmatprep.mubr.f32.mxu0 0.0
    %450 = vmatmul.mubr.f32.gmra.mxu0 %v82
    %v451 = vpop.f32.mrf.mxu0
    %v452 = vadd.f32 0.0, %v451
    %v453 = vpop.f32.mrf.mxu0
    %454 = vdwg.mxu0
    %v455 = vadd.f32 %v201, %v452
    %v456 = vxor.u32 %v455, 2147483648
    %v457 = vmul.f32 %v456, 1.442695
    %v458 = vpow.pop %v457
    %v459 = vadd.f32 %v458, 1.0
    %v460 = vrcp.pop %v459
    %v461 = vmul.f32 1.0, %v460
    %v462 = vmul.f32 %v461, %v82
    %v463 = vld [vmem:[#allocation7] sm:$0xff]
    %v464 = vld [vmem:[#allocation7 + $0x8] sm:$0xff]
    %v465 = vld [vmem:[#allocation7 + $0x10] sm:$0xff]
    %v466 = vld [vmem:[#allocation7 + $0x18] sm:$0xff]
    %v467 = vld [vmem:[#allocation7 + $0x20] sm:$0xff]
    %v468 = vld [vmem:[#allocation7 + $0x28] sm:$0xff]
    %v469 = vld [vmem:[#allocation7 + $0x30] sm:$0xff]
    %v470 = vld [vmem:[#allocation7 + $0x38] sm:$0xff]
    %v471 = vld [vmem:[#allocation7 + $0x40] sm:$0xff]
    %v472 = vld [vmem:[#allocation7 + $0x48] sm:$0xff]
    %v473 = vld [vmem:[#allocation7 + $0x50] sm:$0xff]
    %v474 = vld [vmem:[#allocation7 + $0x58] sm:$0xff]
    %v475 = vld [vmem:[#allocation7 + $0x60] sm:$0xff]
    %v476 = vld [vmem:[#allocation7 + $0x68] sm:$0xff]
    %v477 = vld [vmem:[#allocation7 + $0x70] sm:$0xff]
    %v478 = vld [vmem:[#allocation7 + $0x78] sm:$0xff]
    %479 = vmatprep.subr.mxu0 0.0
    %480 = vmatpush1.msra.mxu0 %v478
    %481 = vmatprep.subr.mxu0 0.0
    %482 = vmatpush1.msra.mxu0 %v477
    %483 = vmatprep.subr.mxu0 0.0
    %484 = vmatpush1.msra.mxu0 %v476
    %485 = vmatprep.subr.mxu0 0.0
    %486 = vmatpush1.msra.mxu0 %v475
    %487 = vmatprep.subr.mxu0 0.0
    %488 = vmatpush1.msra.mxu0 %v474
    %489 = vmatprep.subr.mxu0 0.0
    %490 = vmatpush1.msra.mxu0 %v473
    %491 = vmatprep.subr.mxu0 0.0
    %492 = vmatpush1.msra.mxu0 %v472
    %493 = vmatprep.subr.mxu0 0.0
    %494 = vmatpush1.msra.mxu0 %v471
    %495 = vmatprep.subr.mxu0 0.0
    %496 = vmatpush1.msra.mxu0 %v470
    %497 = vmatprep.subr.mxu0 0.0
    %498 = vmatpush1.msra.mxu0 %v469
    %499 = vmatprep.subr.mxu0 0.0
    %500 = vmatpush1.msra.mxu0 %v468
    %501 = vmatprep.subr.mxu0 0.0
    %502 = vmatpush1.msra.mxu0 %v467
    %503 = vmatprep.subr.mxu0 0.0
    %504 = vmatpush1.msra.mxu0 %v466
    %505 = vmatprep.subr.mxu0 0.0
    %506 = vmatpush1.msra.mxu0 %v465
    %507 = vmatprep.subr.mxu0 0.0
    %508 = vmatpush1.msra.mxu0 %v464
    %509 = vmatprep.subr.mxu0 0.0
    %510 = vmatpush1.msra.mxu0 %v463
    %511 = vmatprep.subr.mxu0 0.0
    %512 = vmatpush2.msra.mxu0 0.0
    %513 = vmatprep.subr.mxu0 0.0
    %514 = vmatpush2.msra.mxu0 0.0
    %515 = vmatprep.subr.mxu0 0.0
    %516 = vmatpush2.msra.mxu0 0.0
    %517 = vmatprep.subr.mxu0 0.0
    %518 = vmatpush2.msra.mxu0 0.0
    %519 = vmatprep.subr.mxu0 0.0
    %520 = vmatpush2.msra.mxu0 0.0
    %521 = vmatprep.subr.mxu0 0.0
    %522 = vmatpush2.msra.mxu0 0.0
    %523 = vmatprep.subr.mxu0 0.0
    %524 = vmatpush2.msra.mxu0 0.0
    %525 = vmatprep.subr.mxu0 0.0
    %526 = vmatpush2.msra.mxu0 0.0
    %527 = vmatprep.subr.mxu0 0.0
    %528 = vmatpush2.msra.mxu0 0.0
    %529 = vmatprep.subr.mxu0 0.0
    %530 = vmatpush2.msra.mxu0 0.0
    %531 = vmatprep.subr.mxu0 0.0
    %532 = vmatpush2.msra.mxu0 0.0
    %533 = vmatprep.subr.mxu0 0.0
    %534 = vmatpush2.msra.mxu0 0.0
    %535 = vmatprep.subr.mxu0 0.0
    %536 = vmatpush2.msra.mxu0 0.0
    %537 = vmatprep.subr.mxu0 0.0
    %538 = vmatpush2.msra.mxu0 0.0
    %539 = vmatprep.subr.mxu0 0.0
    %540 = vmatpush2.msra.mxu0 0.0
    %541 = vmatprep.subr.mxu0 0.0
    %542 = vmatpush2.msra.mxu0 0.0
    %543 = vmatprep.mubr.f32.mxu0 0.0
    %544 = vmatmul.mubr.f32.gmra.mxu0 %v462
    %v545 = vpop.f32.mrf.mxu0
    %v546 = vadd.f32 0.0, %v545
    %v547 = vpop.f32.mrf.mxu0
    %548 = vdwg.mxu0
    %v549 = vadd.f32 %v272, %v546
    %v550 = vtanh.pop %v549
    %v551 = vmul.f32 %v550, %v368
    %v552 = vsub.f32 1.0, %v368
    %v553 = vmul.f32 %v82, %v552
    %v554 = vadd.f32 %v551, %v553
    %555 = vst [vmem:[%s7] sm:$0xff] %v554
    // Predicated region
    $region46: #{gru_cell.1} parent=1 // pred_check
      _
    $region47: #{gru_cell.1} parent=1 // pred_check_branch
      %557 = sbr.rel (0) target = $region49
    $region48: #{gru_cell.1} parent=1 // pred_region
      _
    $region49: #{gru_cell.1} parent=1 // pred_fallthru
      _
    // Predicated region
    $region50: #{gru_cell.1} parent=1 // pred_check
      _
    $region51: #{gru_cell.1} parent=1 // pred_check_branch
      %559 = sbr.rel (0) target = $region53
    $region52: #{gru_cell.1} parent=1 // pred_region
      _
    $region53: #{gru_cell.1} parent=1 // pred_fallthru
      _
    %560 = vsyncpa [#allocation3], 1
    %561 = vsyncpa [#allocation5], 1
    %562 = vsyncpa [#allocation8], 1

</llo_original>
